<compile_context>
chip_gen: v5e
topology: v5e:2x2
jax: 0.10.0
libtpu: 0.0.40
codegen_flags: <defaults>
</compile_context>

<pallas_src>
import jax
import jax.numpy as jnp
from jax import lax
from jax.experimental import pallas as pl
from jax.experimental.pallas import tpu as pltpu


# ---------------------------------------------------------------------------
# Fast path: VMEM-resident table, one-hot MXU gather.
# ---------------------------------------------------------------------------
def _onehot_kernel(ids_ref, table_ref, out_ref):
    # ids_ref   : [tn, 1]   int32  token ids of this tile (VMEM, column layout
    #                              so no lane->sublane relayout is needed)
    # table_ref : [1, V, D]        model m's full table (VMEM-resident)
    # out_ref   : [1, tn, D]       output block for (model m, token tile i)
    tn = out_ref.shape[1]          # static
    vocab = table_ref.shape[1]     # static
    ids = ids_ref[...]                                             # [tn, 1]
    onehot = (ids == lax.broadcasted_iota(jnp.int32, (tn, vocab), 1))
    onehot = onehot.astype(table_ref.dtype)                        # [tn, V]
    out_ref[0] = jnp.dot(onehot, table_ref[0],
                         preferred_element_type=jnp.float32).astype(out_ref.dtype)
    # TODO(synk): for medium-V tables that still fit VMEM, a jnp.take row
    # gather would avoid the tn*V one-hot; such tables currently take the
    # DMA fallback path instead.


# ---------------------------------------------------------------------------
# Fallback path: manual per-row DMA gather straight from HBM.
# ---------------------------------------------------------------------------
def _dma_gather_kernel(ids_ref, table_ref, out_ref, sem):
    # ids_ref   : [n_pad]    int32   SMEM (scalar prefetch), already clamped
    # table_ref : [M, V, D]          HBM (memory_space=pl.ANY, no auto-DMA)
    # out_ref   : [1, tn, D]         VMEM output block for (m, i)
    # sem       : [1]                single shared DMA semaphore
    m = pl.program_id(0)
    i = pl.program_id(1)
    tn = out_ref.shape[1]          # static
    base = i * tn
    # Full unroll for short tiles, partial unroll otherwise: keeps the scalar
    # and misc (DMA-descriptor) slots fed back-to-back.
    unroll = True if tn <= 64 else 8

    def issue(t, carry):
        row = ids_ref[base + t]    # clamp was hoisted to the wrapper
        pltpu.make_async_copy(table_ref.at[m, row],   # one [D] row in HBM
                              out_ref.at[0, t],       # its slot in the tile
                              sem.at[0]).start()
        return carry

    lax.fori_loop(0, tn, issue, 0, unroll=unroll)

    # Every row copy has the same size, so drain with tn waits against a
    # fixed-shape descriptor: no SMEM id reads / clamping on the wait side.
    def drain(t, carry):
        pltpu.make_async_copy(table_ref.at[m, 0], out_ref.at[0, 0],
                              sem.at[0]).wait()
        return carry

    lax.fori_loop(0, tn, drain, 0, unroll=unroll)
    # TODO(synk): padding / tail tokens could skip their DMA and be zero-filled
    # instead (padding row is zero by construction).


# ---------------------------------------------------------------------------
# Wrapper
# ---------------------------------------------------------------------------
def ensemble_src_emb(src, tables, *, max_token_tile=512, force_dma_gather=False):
    """Pallas implementation of EnsembleSrcEmb.forward.

    src    : [B, S] integer token ids
    tables : [M, V, D] stacked embedding tables (padding row zeroed)
    returns: [M, B, S, D]; out[m] is model m's embedding of `src`
             (PyTorch forward returns these as a list).
    """
    M, V, D = tables.shape
    B, S = src.shape
    N = B * S
    dtype = tables.dtype
    itemsize = jnp.dtype(dtype).itemsize

    # --- token-axis tiling -------------------------------------------------
    if N <= max_token_tile:
        tn, n_pad = N, N                       # full-extent block, any size ok
    else:
        tn = max(128, (max_token_tile // 128) * 128)   # lane/sublane friendly
        n_pad = pl.cdiv(N, tn) * tn

    # Clamp once in the wrapper (removed from the kernel hot loops).
    # NOTE: out-of-range ids are clamped to V-1 instead of raising like
    # nn.Embedding would.
    ids = jnp.clip(src.reshape(-1).astype(jnp.int32), 0, V - 1)
    if n_pad != N:
        ids = jnp.concatenate([ids, jnp.zeros((n_pad - N,), jnp.int32)])

    # --- generation-aware VMEM budget ---------------------------------------
    try:
        vmem_cap = int(pltpu.get_tpu_info().vmem_capacity_bytes)
    except Exception:
        vmem_cap = 64 * 1024 * 1024            # conservative (v7x-sized)
    table_budget = (3 * vmem_cap) // 8         # ~48 MiB v5e/v6e, ~24 MiB v7x
    table_bytes = V * D * itemsize             # one (1, V, D) block
    out_blk_bytes = tn * D * itemsize
    onehot_bytes = tn * V * itemsize
    fast_ok = (2 * table_bytes + 2 * out_blk_bytes + onehot_bytes) <= table_budget

    if fast_ok and not force_dma_gather:
        out = pl.pallas_call(
            _onehot_kernel,
            out_shape=jax.ShapeDtypeStruct((M, n_pad, D), dtype),
            grid_spec=pltpu.PrefetchScalarGridSpec(
                num_scalar_prefetch=0,
                grid=(M, n_pad // tn),
                in_specs=[
                    pl.BlockSpec((tn, 1), lambda m, i: (i, 0)),       # ids col
                    pl.BlockSpec((1, V, D), lambda m, i: (m, 0, 0)),  # table m
                ],
                out_specs=pl.BlockSpec((1, tn, D), lambda m, i: (m, i, 0)),
            ),
            compiler_params=pltpu.CompilerParams(
                dimension_semantics=("parallel", "parallel"),
                vmem_limit_bytes=int(min(vmem_cap * 3 // 4, 96 * 1024 * 1024)),
            ),
        )(ids.reshape(n_pad, 1), tables)
    else:
        out = pl.pallas_call(
            _dma_gather_kernel,
            out_shape=jax.ShapeDtypeStruct((M, n_pad, D), dtype),
            grid_spec=pltpu.PrefetchScalarGridSpec(
                num_scalar_prefetch=1,         # ids -> SMEM for DMA addressing
                grid=(M, n_pad // tn),
                in_specs=[pl.BlockSpec(memory_space=pl.ANY)],   # tables in HBM
                out_specs=pl.BlockSpec((1, tn, D), lambda m, i, ids: (m, i, 0)),
                scratch_shapes=[pltpu.SemaphoreType.DMA((1,))],  # shared sem
            ),
            compiler_params=pltpu.CompilerParams(
                dimension_semantics=("parallel", "parallel"),
            ),
        )(ids, tables)

    if n_pad != N:
        out = out[:, :N, :]
    return out.reshape(M, B, S, D)


def make_ensemble_tables(key, n_models, vocab, dim, padding_idx):
    """Deterministic synthetic embedding tables (one per ensemble member)."""
    keys = jax.random.split(key, n_models)
    tabs = []
    for k in keys:
        t = jax.random.normal(k, (vocab, dim), dtype=jnp.float32) * 0.02
        t = t.at[padding_idx].set(0.0)   # nn.Embedding(padding_idx=...) semantics
        tabs.append(t)
    return jnp.stack(tabs, axis=0)       # [M, V, D]
    # TODO(synk): real eole SrcEmb may also add positional encoding / dropout;
    # only the word-embedding lookup (the delegated hot path) is implemented.


if __name__ == "__main__":
    key = jax.random.PRNGKey(0)
    k_tab, k_src, k_src2 = jax.random.split(key, 3)

    n_models, vocab, dim = 3, 64, 32
    batch, seq = 2, 8
    word_padding_idx = 1

    tables = make_ensemble_tables(k_tab, n_models, vocab, dim, word_padding_idx)
    src = jax.random.randint(k_src, (batch, seq), 0, vocab, dtype=jnp.int32)
    src = src.at[:, -1].set(word_padding_idx)   # force some padding tokens

    def check(emb, src_):
        b_, s_ = src_.shape
        assert emb.shape == (n_models, b_, s_, dim)
        for m in range(n_models):
            ref = jnp.take(tables[m], src_, axis=0)     # [B, S, D]
            assert jnp.allclose(emb[m], ref, atol=1e-5), f"mismatch model {m}"

    # 1) VMEM-resident-table fast path (one-hot MXU gather), single tile.
    emb_fast = ensemble_src_emb(src, tables)
    jax.block_until_ready(emb_fast)
    check(emb_fast, src)

    # 2) HBM DMA row-gather fallback (forced), same inputs -> bitwise gather.
    emb_dma = ensemble_src_emb(src, tables, force_dma_gather=True)
    jax.block_until_ready(emb_dma)
    check(emb_dma, src)

    # 3) Multi-tile fast path (token axis tiled across grid steps).
    src_big = jax.random.randint(k_src2, (4, 64), 0, vocab, dtype=jnp.int32)
    emb_big = ensemble_src_emb(src_big, tables, max_token_tile=128)
    jax.block_until_ready(emb_big)
    check(emb_big, src_big)

    # 4) Multi-tile DMA fallback (partial unroll, shared semaphore drain).
    emb_big_dma = ensemble_src_emb(src_big, tables, max_token_tile=128,
                                   force_dma_gather=True)
    jax.block_until_ready(emb_big_dma)
    check(emb_big_dma, src_big)

    print("KERNEL_OK")
</pallas_src>

<mosaic_0001>
module attributes {stable_mosaic.version = 11 : i64} {
  func.func @_onehot_kernel(%arg0: i32, %arg1: i32, %arg2: memref<16x1xi32, #tpu.memory_space<vmem>>, %arg3: memref<1x64x32xf32, #tpu.memory_space<vmem>>, %arg4: memref<1x16x32xf32, #tpu.memory_space<vmem>>) attributes {dimension_semantics = [#tpu.dimension_semantics<parallel>, #tpu.dimension_semantics<parallel>], iteration_bounds = array<i64: 3, 1>, scalar_prefetch = 0 : i64, scratch_operands = 0 : i64, tpu.core_type = #tpu.core_type<tc>, window_params = [{transform_indices = @transform_0, window_bounds = array<i64: 16, 1>}, {transform_indices = @transform_1, window_bounds = array<i64: 1, 64, 32>}, {transform_indices = @transform_2, window_bounds = array<i64: 1, 16, 32>}]} {
    %c0 = arith.constant 0 : index
    %c0_0 = arith.constant 0 : index
    %0 = vector.load %arg2[%c0, %c0_0] : memref<16x1xi32, #tpu.memory_space<vmem>>, vector<16x1xi32>
    %1 = tpu.iota {dimensions = array<i32: 1>} : vector<16x64xi32>
    %2 = vector.broadcast %0 : vector<16x1xi32> to vector<16x64xi32>
    %3 = arith.cmpi eq, %2, %1 : vector<16x64xi32>
    %4 = arith.extui %3 : vector<16x64xi1> to vector<16x64xi32>
    %5 = arith.sitofp %4 : vector<16x64xi32> to vector<16x64xf32>
    %c0_1 = arith.constant 0 : index
    %c0_2 = arith.constant 0 : index
    %c0_3 = arith.constant 0 : index
    %6 = vector.load %arg3[%c0_1, %c0_2, %c0_3] : memref<1x64x32xf32, #tpu.memory_space<vmem>>, vector<1x64x32xf32>
    %7 = vector.shape_cast %6 : vector<1x64x32xf32> to vector<64x32xf32>
    %cst = arith.constant dense<0.000000e+00> : vector<16x32xf32>
    %8 = tpu.matmul %5, %7, %cst {dimension_numbers = #tpu.dot_dimension_numbers<[1], [0], [0], [1], [0, 0, 1, 1], [], []>} : vector<16x64xf32>, vector<64x32xf32>, vector<16x32xf32> -> vector<16x32xf32>
    %c0_4 = arith.constant 0 : index
    %c0_5 = arith.constant 0 : index
    %c0_6 = arith.constant 0 : index
    %9 = vector.load %arg4[%c0_4, %c0_5, %c0_6] : memref<1x16x32xf32, #tpu.memory_space<vmem>>, vector<1x16x32xf32>
    %10 = vector.shape_cast %9 : vector<1x16x32xf32> to vector<16x32xf32>
    %11 = vector.shape_cast %8 : vector<16x32xf32> to vector<1x16x32xf32>
    tpu.vector_store %arg4[%c0_4, %c0_5, %c0_6], %11 {strides = array<i32>} : memref<1x16x32xf32, #tpu.memory_space<vmem>>, vector<1x16x32xf32>,
    return
  }
  func.func @transform_0(%arg0: i32, %arg1: i32) -> (i32, i32) {
    %c0_i32 = arith.constant 0 : i32
    %c0_i32_0 = arith.constant 0 : i32
    return %arg1, %c0_i32 : i32, i32
  }
  func.func @transform_1(%arg0: i32, %arg1: i32) -> (i32, i32, i32) {
    %c0_i32 = arith.constant 0 : i32
    %c0_i32_0 = arith.constant 0 : i32
    %c0_i32_1 = arith.constant 0 : i32
    return %arg0, %c0_i32, %c0_i32_0 : i32, i32, i32
  }
  func.func @transform_2(%arg0: i32, %arg1: i32) -> (i32, i32, i32) {
    %c0_i32 = arith.constant 0 : i32
    %c0_i32_0 = arith.constant 0 : i32
    return %arg0, %arg1, %c0_i32 : i32, i32, i32
  }
}

</mosaic_0001>

<llo_original>
// kernel: tpu_custom_call.1
$region0: #{tpu_custom_call.1}
  #allocation0 [shape = 'u32[]', space=smem, size = 0x4, offset = 0x4, fixed_abs, tag = 'smem constant byte address 0x4 - core index']
  #allocation1 [shape = 'u32[72,128]{1,0:T(1,128)}', space=vmem, size = 0x9000, scoped, tag = 'internal scratch']
  %s0 = inlined_call_operand.vmem [shape: s32[16,1], index: 0, kind: input, shape index: {}]
  %s1 = inlined_call_operand.vmem [shape: f32[3,64,32], index: 1, kind: input, shape index: {}]
  %s2 = inlined_call_operand.hbm [shape: f32[3,16,32], index: 2, kind: output, shape index: {}]
  %s3 = sld [smem:[#allocation0]]
  $region41: #{tpu_custom_call.1} parent=0
    _
  %s5 = ssub.s32 1, %s3
  %s6 = scalar_select 0, %s5, %s3
  $region1: #{tpu_custom_call.1} parent=0
    #allocation2 [shape = 'u8[16384]{0}', space=vmem, size = 0x4000, scoped, tag = 'output window, operand 0']
    #allocation3 [shape = 's32[2]{0}', space=sflag, size = 0x8, scoped, tag = 'scoped memory for tpu_custom_call.1']
    %7 = vsyncpa [#allocation3], 0
    %s8 = scalar_lea.sflag [#allocation3], 1
    %9 = vsyncpa %s8, 0
    loop: start=0, step=1, limit=5
    $region2: #{tpu_custom_call.1} parent=1 // loop_pre_header
      _
    $region3: #{tpu_custom_call.1} parent=1 // loop_header
      %s11 = sphi 0, %s15
      %p12 = scmp.ge.s32.totalorder %s11, 5
      %s18 = sphi 0, %s30
      %s19 = sphi 0, %s26
      %s20 = sphi 0, %s18
      %s21 = sphi 0, %s19
      %s22 = sphi 0, %s20
      %s23 = sphi 0, %s21
      %s33 = sphi 0, %s35
      %s36 = sphi 0, %s33
      %s37 = sphi 0, %s36
      %s53 = sphi 0, %s37
      %s59 = sphi 0, %s61
      %s62 = sphi 0, %s59
      %s63 = sphi 0, %s62
      %s79 = sphi 0, %s63
      %s87 = sphi 0, %s89
      %s90 = sphi 0, %s87
      %s91 = sphi 0, %s90
      %s107 = sphi 0, %s91
    $region4: #{tpu_custom_call.1} parent=1 // loop_header_branch
      %14 = sbr.rel (%p12) target = $region8
    $region5: #{tpu_custom_call.1} parent=1 // loop_body
      %s16 = ssub.s32 %s11, 1
      %s17 = ssub.s32 %s11, 2
      %s24 = sadd.s32 1, %s19
      %p25 = scmp.ge.s32.totalorder %s24, 1
      %s26 = scalar_select %p25, 0, %s24
      %s27 = sadd.s32 1, %s18
      %s28 = scalar_select %p25, %s27, %s18
      %p29 = scmp.ge.s32.totalorder %s28, 3
      %s30 = scalar_select %p29, 0, %s28
      %s31 = ssub.s32 %s19, %s26
      %p32 = scmp.eq.s32.totalorder %s31, 0
      %s34 = sadd.s32 %s33, 1
      %s35 = scalar_select %p32, %s33, %s34
      %p38 = pneg %p32
      %p39 = scmp.eq.s32.totalorder %s11, 2
      %p40 = por %p38, %p39
      %p41 = scmp.ne.s32.totalorder %s33, %s36
      %p42 = scmp.eq.s32.totalorder %s11, 0
      %p43 = por %p41, %p42
      %p44 = scmp.ne.s32.totalorder %s33, %s36
      %p45 = scmp.eq.s32.totalorder %s16, 2
      %p46 = por %p44, %p45
      %p47 = scmp.ne.s32.totalorder %s36, %s37
      %p48 = scmp.eq.s32.totalorder %s16, 0
      %p49 = por %p47, %p48
      %p50 = scmp.ne.s32.totalorder %s36, %s37
      %p51 = scmp.eq.s32.totalorder %s17, 2
      %p52 = por %p50, %p51
      %p54 = scmp.ne.s32.totalorder %s37, %s53
      %p55 = scmp.eq.s32.totalorder %s17, 0
      %p56 = por %p54, %p55
      %s57 = ssub.s32 %s18, %s30
      %p58 = scmp.eq.s32.totalorder %s57, 0
      %s60 = sadd.s32 %s59, 1
      %s61 = scalar_select %p58, %s59, %s60
      %p64 = pneg %p58
      %p65 = scmp.eq.s32.totalorder %s11, 2
      %p66 = por %p64, %p65
      %p67 = scmp.ne.s32.totalorder %s59, %s62
      %p68 = scmp.eq.s32.totalorder %s11, 0
      %p69 = por %p67, %p68
      %p70 = scmp.ne.s32.totalorder %s59, %s62
      %p71 = scmp.eq.s32.totalorder %s16, 2
      %p72 = por %p70, %p71
      %p73 = scmp.ne.s32.totalorder %s62, %s63
      %p74 = scmp.eq.s32.totalorder %s16, 0
      %p75 = por %p73, %p74
      %p76 = scmp.ne.s32.totalorder %s62, %s63
      %p77 = scmp.eq.s32.totalorder %s17, 2
      %p78 = por %p76, %p77
      %p80 = scmp.ne.s32.totalorder %s63, %s79
      %p81 = scmp.eq.s32.totalorder %s17, 0
      %p82 = por %p80, %p81
      %s83 = ssub.s32 %s18, %s30
      %s84 = ssub.s32 %s19, %s26
      %s85 = sor.u32 %s83, %s84
      %p86 = scmp.eq.s32.totalorder %s85, 0
      %s88 = sadd.s32 %s87, 1
      %s89 = scalar_select %p86, %s87, %s88
      %p92 = pneg %p86
      %p93 = scmp.eq.s32.totalorder %s11, 2
      %p94 = por %p92, %p93
      %p95 = scmp.ne.s32.totalorder %s87, %s90
      %p96 = scmp.eq.s32.totalorder %s11, 0
      %p97 = por %p95, %p96
      %p98 = scmp.ne.s32.totalorder %s87, %s90
      %p99 = scmp.eq.s32.totalorder %s16, 2
      %p100 = por %p98, %p99
      %p101 = scmp.ne.s32.totalorder %s90, %s91
      %p102 = scmp.eq.s32.totalorder %s16, 0
      %p103 = por %p101, %p102
      %p104 = scmp.ne.s32.totalorder %s90, %s91
      %p105 = scmp.eq.s32.totalorder %s17, 2
      %p106 = por %p104, %p105
      %p108 = scmp.ne.s32.totalorder %s91, %s107
      %p109 = scmp.eq.s32.totalorder %s17, 0
      %p110 = por %p108, %p109
      %p111 = scmp.le.s32.totalorder 1, %s11
      %p112 = scmp.lt.s32.totalorder %s11, 4
      %p113 = pnand %p111, %p112
      %p114 = pneg %p113
      // Predicated region
      $region9: #{tpu_custom_call.1} parent=5 // pred_check
        _
      $region10: #{tpu_custom_call.1} parent=5 // pred_check_branch
        %116 = sbr.rel (%p113) target = $region12
      $region11: #{tpu_custom_call.1} parent=5 // pred_region
        %s117 = ssub.s32 %s11, 1
        // Predicated region
        $region13: #{tpu_custom_call.1} parent=11 // pred_check
          %p118 = pneg %p49
        $region14: #{tpu_custom_call.1} parent=11 // pred_check_branch
          %120 = sbr.rel (%p118) target = $region16
        $region15: #{tpu_custom_call.1} parent=11 // pred_region
          %s121 = smul.u32 2, %s21
          %p122 = scmp.lt.s32.totalorder %s121, 1
          %s123 = scalar_select %p122, %s121, 1
          %s124 = smul.addr %s123, 8
          %s125 = scalar_lea.vmem %s0, %s124
          %s126 = smul.u32 2, %s21
        $region16: #{tpu_custom_call.1} parent=11 // pred_fallthru
          _
      $region12: #{tpu_custom_call.1} parent=5 // pred_fallthru
        _
      %p127 = scmp.lt.s32.totalorder %s11, 3
      // Predicated region
      $region17: #{tpu_custom_call.1} parent=5 // pred_check
        %p128 = pneg %p127
      $region18: #{tpu_custom_call.1} parent=5 // pred_check_branch
        %130 = sbr.rel (%p128) target = $region20
      $region19: #{tpu_custom_call.1} parent=5 // pred_region
        // Predicated region
        $region21: #{tpu_custom_call.1} parent=19 // pred_check
          %p131 = pneg %p69
        $region22: #{tpu_custom_call.1} parent=19 // pred_check_branch
          %133 = sbr.rel (%p131) target = $region24
        $region23: #{tpu_custom_call.1} parent=19 // pred_region
          %p134 = scmp.lt.s32.totalorder %s18, 2
          %s135 = scalar_select %p134, %s18, 2
          %s136 = smul.addr %s135, 8
          %s137 = smul.addr %s136, 8
          %s138 = scalar_lea.vmem %s1, %s137
        $region24: #{tpu_custom_call.1} parent=19 // pred_fallthru
          _
      $region20: #{tpu_custom_call.1} parent=5 // pred_fallthru
        _
      %p139 = scmp.le.s32.totalorder 1, %s11
      %p140 = scmp.lt.s32.totalorder %s11, 4
      %p141 = pnand %p139, %p140
      %p142 = pneg %p141
      // Predicated region
      $region25: #{tpu_custom_call.1} parent=5 // pred_check
        _
      $region26: #{tpu_custom_call.1} parent=5 // pred_check_branch
        %144 = sbr.rel (%p141) target = $region28
      $region27: #{tpu_custom_call.1} parent=5 // pred_region
        %s145 = ssub.s32 %s11, 1
        %s146 = smul.u32 2, %s21
        %p147 = scmp.lt.s32.totalorder %s146, 1
        %s148 = scalar_select %p147, %s146, 1
        %s149 = smul.addr %s148, 8
        %s150 = scalar_lea.vmem %s0, %s149
        %p151 = pneg %p49
        %p152 = pneg %p46
        %p153 = scmp.lt.s32.totalorder %s20, 2
        %s154 = scalar_select %p153, %s20, 2
        %s155 = smul.addr %s154, 8
        %s156 = smul.addr %s155, 8
        %s157 = scalar_lea.vmem %s1, %s156
        %p158 = pneg %p75
        %p159 = pneg %p72
        %p160 = pneg %p103
        %p161 = pneg %p100
        %s162 = sand.u32 %s90, 1
        %s163 = scalar_lea.sflag [#allocation3], %s162
        %s164 = sand.u32 %s90, 1
        %s165 = smul.addr %s164, 16
        %s166 = scalar_lea.vmem [#allocation2], %s165
        %s167 = smul.u32 2, %s21
        %p168 = scmp.lt.s32.totalorder %s167, 1
        %s169 = scalar_select %p168, %s167, 1
        %s170 = smul.addr %s169, 8
        %s171 = scalar_lea.vmem %s0, %s170
        %s172 = smul.u32 2, %s21
        %p173 = scmp.lt.s32.totalorder %s20, 2
        %s174 = scalar_select %p173, %s20, 2
        %s175 = smul.addr %s174, 8
        %s176 = smul.addr %s175, 8
        %s177 = scalar_lea.vmem %s1, %s176
        %s178 = smul.u32 2, %s21
        %v179 = vld [vmem:[%s171] sm:$0xff]
        %v180 = vld [vmem:[%s171 + $0x8] sm:$0xff]
        %v181 = vlaneseq
        %v182 = vand.u32 %v181, 127
        %183 = vset.pattern.permute.xlu0 0
        %184 = vperm.xlu0 %183, %v179
        %v185 = vpop.permute.xlu0 %184
        %186 = vset.pattern.permute.xlu0 0
        %187 = vperm.xlu0 %186, %v180
        %v188 = vpop.permute.xlu0 %187
        %vm189 = vcmp.eq.s32.totalorder %v185, %v182
        %vm190 = vcmp.eq.s32.totalorder %v188, %v182
        %v191 = vsel %vm189, 1, 0
        %v192 = vsel %vm190, 1, 0
        %v193 = vcvt.s32.f32 %v191
        %v194 = vcvt.s32.f32 %v192
        %v195 = vld [vmem:[%s177] sm:$0xff]
        %v196 = vld [vmem:[%s177 + $0x8] sm:$0xff]
        %v197 = vld [vmem:[%s177 + $0x10] sm:$0xff]
        %v198 = vld [vmem:[%s177 + $0x18] sm:$0xff]
        %v199 = vld [vmem:[%s177 + $0x20] sm:$0xff]
        %v200 = vld [vmem:[%s177 + $0x28] sm:$0xff]
        %v201 = vld [vmem:[%s177 + $0x30] sm:$0xff]
        %v202 = vld [vmem:[%s177 + $0x38] sm:$0xff]
        %vm203 = vcmask 523264
        %v205 = vsel %vm203, %v193, 0
        %v208 = vsel %vm203, %v194, 0
        %210 = vmatpush.msra.mxu0 0.0
        %211 = vmatpush.msra.mxu0 0.0
        %212 = vmatpush.msra.mxu0 0.0
        %213 = vmatpush.msra.mxu0 0.0
        %214 = vmatpush.msra.mxu0 0.0
        %215 = vmatpush.msra.mxu0 0.0
        %216 = vmatpush.msra.mxu0 0.0
        %217 = vmatpush.msra.mxu0 0.0
        %218 = vmatpush.msra.mxu0 %v202
        %219 = vmatpush.msra.mxu0 %v201
        %220 = vmatpush.msra.mxu0 %v200
        %221 = vmatpush.msra.mxu0 %v199
        %222 = vmatpush.msra.mxu0 %v198
        %223 = vmatpush.msra.mxu0 %v197
        %224 = vmatpush.msra.mxu0 %v196
        %225 = vmatpush.msra.mxu0 %v195
        %226 = vmatmul.f32.gmra.mxu0 %v205
        %v227 = vpop.f32.mrf.mxu0
        %v228 = vadd.f32 0.0, %v227
        %229 = vmatmul.f32.gmra.mxu0 %v208
        %v230 = vpop.f32.mrf.mxu0
        %v231 = vadd.f32 0.0, %v230
        %232 = vdwg.mxu0
        %vm233 = vcmask 261120
        %234 = vst.msk [vmem:[%s166] sm:$0xff] %vm233, %v228
        %235 = vst.msk [vmem:[%s166 + $0x8] sm:$0xff] %vm233, %v231
        %s236 = sand.u32 %s90, 1
        %s237 = scalar_lea.sflag [#allocation3], %s236
        %s238 = sand.u32 %s90, 1
        %s239 = smul.addr %s238, 16
        %s240 = scalar_lea.vmem [#allocation2], %s239
        // Predicated region
        $region29: #{tpu_custom_call.1} parent=27 // pred_check
          %p241 = pneg %p100
        $region30: #{tpu_custom_call.1} parent=27 // pred_check_branch
          %243 = sbr.rel (%p241) target = $region32
        $region31: #{tpu_custom_call.1} parent=27 // pred_region
          %s244 = smul.u32 2, %s21
          %246 = vsyncadd %s237, 0
          %s247 = smul.addr %s20, 2
          %s248 = sadd.s32 %s244, %s247
          %s249 = smul.addr %s248, 8
          %s250 = scalar_lea.hbm %s2, %s249
          %s251 = sshll.u32 %s240, 4
          %s252 = int_to_ptr.vmem [resolvable:$true] %s251
          %s253 = sshll.u32 %s250, 4
          %s254 = int_to_ptr.hbm [resolvable:$true] %s253
          %259 = dma.vmem_to_hbm [thread:$0]  %s252, 256, %s254, %s237, 128, 128, 8
        $region32: #{tpu_custom_call.1} parent=27 // pred_fallthru
          _
      $region28: #{tpu_custom_call.1} parent=5 // pred_fallthru
        _
      %p260 = scmp.le.s32.totalorder 2, %s11
      // Predicated region
      $region33: #{tpu_custom_call.1} parent=5 // pred_check
        %p261 = pneg %p260
      $region34: #{tpu_custom_call.1} parent=5 // pred_check_branch
        %263 = sbr.rel (%p261) target = $region36
      $region35: #{tpu_custom_call.1} parent=5 // pred_region
        %s264 = ssub.s32 %s11, 2
        // Predicated region
        $region37: #{tpu_custom_call.1} parent=35 // pred_check
          %p265 = pneg %p106
        $region38: #{tpu_custom_call.1} parent=35 // pred_check_branch
          %267 = sbr.rel (%p265) target = $region40
        $region39: #{tpu_custom_call.1} parent=35 // pred_region
          %s268 = sand.u32 %s91, 1
          %s269 = scalar_lea.sflag [#allocation3], %s268
          %s270 = sand.u32 %s91, 1
          %s271 = smul.addr %s270, 16
          %s272 = scalar_lea.vmem [#allocation2], %s271
          %274 = dma.done %s269, 256
        $region40: #{tpu_custom_call.1} parent=35 // pred_fallthru
          _
      $region36: #{tpu_custom_call.1} parent=5 // pred_fallthru
        _
    $region6: #{tpu_custom_call.1} parent=1 // loop_footer
      %s15 = sadd.s32 1, %s11
    $region7: #{tpu_custom_call.1} parent=1 // loop_footer_branch
      %10 = sbr.rel target = $region3
    $region8: #{tpu_custom_call.1} parent=1 // loop_exit
      _
    %275 = vsyncpa [#allocation3], 1
    %s276 = scalar_lea.sflag [#allocation3], 1
    %277 = vsyncpa %s276, 1

</llo_original>
